<compile_context>
chip_gen: v7x
topology: tpu7x:2x2x1
jax: 0.10.0
libtpu: 0.0.40
codegen_flags: <defaults>
</compile_context>

<pallas_src>
import functools

import jax
import jax.numpy as jnp
import numpy as np
from jax.experimental import pallas as pl
from jax.experimental.pallas import tpu as pltpu

_MAX_TILE_T = 8192  # beyond this, per-step overhead is already <10% and the kernel's
                    # vector temporaries (iota / compare / select, ~4-5x the block) grow.


def _greedy_ctc_kernel(em_ref, out_ref, carry_ref, *, blank: int, true_t: int,
                       lane_dense: bool):
    """One (batch, T-tile) grid step.

    em_ref:    [1, tile_t, V]   logits tile (f32 or bf16 -- dtype agnostic)
    out_ref:   [1, 1, tile_t]   (lane-dense) or [1, tile_t, 1] (fallback) int32:
               label index if kept after dedup + blank filter, else -1
    carry_ref: [1, 1] VMEM      raw argmax of the last row of the previous T-tile
    """
    t_tile = pl.program_id(1)

    em = em_ref[0]                                        # [tile_t, V]
    tt, v = em.shape

    # --- argmax over the vocab (lane) axis, first-index-on-ties (matches np/torch) ---
    col_ids = jax.lax.broadcasted_iota(jnp.int32, (tt, v), 1)
    max_val = jnp.max(em, axis=-1, keepdims=True)         # [tt, 1]
    idx = jnp.min(jnp.where(em == max_val, col_ids, v),
                  axis=-1, keepdims=True)                 # [tt, 1] int32
    # NaN-safe clamp: rows whose max is NaN would otherwise yield V (OOB on the host).
    # Note: this diverges from torch.argmax for (partially-)NaN rows -- model logits
    # are finite, so this is a documented, intentional simplification.
    idx = jnp.minimum(idx, v - 1)

    # --- unique_consecutive across the tile AND across tile boundaries (carried) ---
    rolled = pltpu.roll(idx, shift=1, axis=0)             # rolled[0] == idx[tt-1] (wraps)
    carried = carry_ref[...]                               # [1, 1] prev tile's last argmax
    carried = jnp.where(t_tile == 0, jnp.full_like(carried, -1), carried)
    row_ids = jax.lax.broadcasted_iota(jnp.int32, (tt, 1), 0)
    prev = jnp.where(row_ids == 0, carried, rolled)        # [tt, 1]

    # In-kernel tail mask replaces the old host-side padding concatenate: rows past the
    # true T (garbage data of a partial last block) are forced to -1.
    in_range = (t_tile * tt + row_ids) < true_t
    keep = (idx != prev) & (idx != blank) & in_range

    # Single packed output: kept index, or -1 when dropped (duplicate / blank / padding).
    packed = jnp.where(keep, idx, -1)                       # [tt, 1]

    # Carry this tile's last raw argmax into the next T-tile (garbage on the final,
    # partial tile, but it is never read: the carry resets at t_tile == 0).
    carry_ref[...] = idx[tt - 1:tt, :]

    if lane_dense:
        out_ref[...] = packed.reshape(1, 1, tt)            # sublane->lane relayout (XLU)
    else:
        out_ref[...] = packed.reshape(1, tt, 1)             # proven column layout


def _vmem_capacity_bytes() -> int:
    """Physical per-core VMEM (generation-aware); conservative fallback if unavailable."""
    try:
        cap = int(getattr(pltpu.get_tpu_info(), "vmem_capacity_bytes", 0))
        if cap > 0:
            return cap
    except Exception:
        pass
    return 64 << 20  # v7x per-core physical VMEM; safe lower bound for v5e/v6e too.


def _pick_tile_t(t: int, v: int, itemsize: int, vmem_cap: int) -> int:
    """Pick the largest T tile that amortizes per-grid-step overhead while keeping the
    double-buffered input block plus in-kernel vector temporaries well inside VMEM."""
    max_block_bytes = min(2 << 20, vmem_cap // 16)
    rows_budget = max(8, max_block_bytes // max(1, v * itemsize))
    rows_cap = min(_MAX_TILE_T, rows_budget)
    if t <= rows_cap:
        return t                       # single tile: block dims == array dims (always legal)
    # dtype-aware packing granularity (8 rows f32, 16 bf16, 32 int8/fp8); 128-alignment
    # keeps the lane-dense output block legal and is a multiple of every granularity.
    gran = max(8, 32 // max(1, itemsize))
    aligned = (rows_cap // 128) * 128
    if aligned >= 128:
        return aligned
    return max(gran, (rows_cap // gran) * gran)


def greedy_ctc_indices(emissions: jax.Array, blank: int = 0,
                       tile_t: int | None = None) -> jax.Array:
    """Decode the FULL batch on device.  Returns int32 [B, T]: the kept label index per
    time step, or -1 where the step is dropped (duplicate or blank)."""
    b, t, v = emissions.shape
    itemsize = emissions.dtype.itemsize
    vmem_cap = _vmem_capacity_bytes()
    if tile_t is None:
        tile_t = _pick_tile_t(t, v, itemsize, vmem_cap)
    tile_t = min(tile_t, t)
    assert tile_t == t or tile_t % 8 == 0, "tile_t must be a multiple of 8 (or == T)"

    n_t = pl.cdiv(t, tile_t)
    # Lane-dense output block is only legal if it is a full-T single block or 128-aligned.
    lane_dense_ok = (n_t == 1) or (tile_t % 128 == 0)

    in_block_bytes = tile_t * v * itemsize
    vmem_limit = int(min(max(32 << 20, 10 * in_block_bytes + (2 << 20)),
                         (vmem_cap * 3) // 4))
    cparams = pltpu.CompilerParams(
        dimension_semantics=("parallel", "arbitrary"),   # batch parallel, T sequential
        vmem_limit_bytes=vmem_limit)
    cost = pl.CostEstimate(flops=3 * b * t * v, transcendentals=0,
                           bytes_accessed=b * t * v * itemsize + b * t * 4)

    def build(lane_dense: bool):
        if lane_dense:
            out_shape = jax.ShapeDtypeStruct((b, 1, t), jnp.int32)
            out_spec = pl.BlockSpec((1, 1, tile_t), lambda bi, ti: (bi, 0, ti))
        else:
            out_shape = jax.ShapeDtypeStruct((b, t, 1), jnp.int32)
            out_spec = pl.BlockSpec((1, tile_t, 1), lambda bi, ti: (bi, ti, 0))
        return pl.pallas_call(
            functools.partial(_greedy_ctc_kernel, blank=blank, true_t=t,
                              lane_dense=lane_dense),
            out_shape=out_shape,
            grid_spec=pltpu.PrefetchScalarGridSpec(
                num_scalar_prefetch=0,
                grid=(b, n_t),
                in_specs=[pl.BlockSpec((1, tile_t, v), lambda bi, ti: (bi, ti, 0))],
                out_specs=out_spec,
                scratch_shapes=[pltpu.VMEM((1, 1), jnp.int32)],  # cross-tile dedup carry
            ),
            compiler_params=cparams,
            cost_estimate=cost,
        )

    if lane_dense_ok:
        try:
            out = build(True)(emissions)
            return jnp.reshape(out, (b, t))
        except Exception:
            pass  # column->row relayout not supported on this toolchain: use column path
    out = build(False)(emissions)
    return jnp.reshape(out, (b, t))


def _assemble_words(kept_indices, labels):
    # TODO(synk): string join / '|'->' ' replace / strip / split has no Pallas equivalent
    # (host-side, exactly as in the PyTorch module).
    joined = ''.join(labels[int(i)] for i in kept_indices)
    return joined.replace('|', ' ').strip().split()


def greedy_ctc_decode(emissions: jax.Array, labels, blank: int = 0,
                      tile_t: int | None = None):
    """JAX/Pallas equivalent of GreedyCTCDecoder.forward: decodes emissions[0] to words."""
    packed = greedy_ctc_indices(emissions, blank=blank, tile_t=tile_t)   # [B, T] int32
    row = np.asarray(jax.device_get(packed))[0]          # single D2H transfer
    kept = row[row >= 0]                                  # vectorized dedup+blank result
    return _assemble_words(kept, labels), packed


def _reference_kept_indices(emission_np: np.ndarray, blank: int = 0) -> np.ndarray:
    """Pure-numpy replica of argmax + unique_consecutive + blank filter."""
    idx = np.argmax(emission_np, axis=-1)
    keep = np.ones(idx.shape, dtype=bool)
    keep[1:] = idx[1:] != idx[:-1]
    keep &= idx != blank
    return idx[keep]


if __name__ == "__main__":
    # Vocabulary: blank at 0, word separator '|' at 1, then letters / punctuation. V = 32.
    labels = ['-', '|'] + [chr(ord('a') + i) for i in range(26)] + ["'", '.', ',', '?']
    assert len(labels) == 32

    key = jax.random.PRNGKey(0)
    k1, k2 = jax.random.split(key)

    # Case 1: module-equivalent decode of emissions[0], auto (single-tile) path.
    B, T, V = 2, 40, 32
    emissions = jax.random.normal(k1, (B, T, V), dtype=jnp.float32)
    em_np = np.asarray(jax.device_get(emissions))
    words, packed = greedy_ctc_decode(emissions, labels, blank=0)
    jax.block_until_ready(packed)
    ref_words = _assemble_words(_reference_kept_indices(em_np[0], 0), labels)
    assert words == ref_words, f"mismatch: pallas={words} ref={ref_words}"

    # Case 2: longer T, forced tile_t=128 -> multi-tile carry, partial last tile
    # (300 % 128 != 0, in-kernel tail mask) and the lane-dense multi-tile path;
    # full-batch check, non-zero blank too.
    T2 = 300
    em2 = jax.random.normal(k2, (B, T2, V), dtype=jnp.float32)
    em2_np = np.asarray(jax.device_get(em2))
    for blank in (0, 3):
        pk = greedy_ctc_indices(em2, blank=blank, tile_t=128)
        pk_np = np.asarray(jax.device_get(pk))
        for bi in range(B):
            got = pk_np[bi][pk_np[bi] >= 0]
            ref = _reference_kept_indices(em2_np[bi], blank)
            assert np.array_equal(got, ref), (blank, bi, got.tolist(), ref.tolist())

    # Case 3: tiny forced tile (16) -> exercises the non-128-aligned column-layout path,
    # cross-tile dedup carry and tail masking (40 % 16 != 0).
    pk = greedy_ctc_indices(emissions, blank=0, tile_t=16)
    pk_np = np.asarray(jax.device_get(pk))
    for bi in range(B):
        got = pk_np[bi][pk_np[bi] >= 0]
        ref = _reference_kept_indices(em_np[bi], 0)
        assert np.array_equal(got, ref), (bi, got.tolist(), ref.tolist())

    # Case 4: bf16 emissions (halves HBM traffic on this memory-bound kernel).
    em16 = emissions.astype(jnp.bfloat16)
    pk16 = greedy_ctc_indices(em16, blank=0)
    pk16_np = np.asarray(jax.device_get(pk16))
    em16_up = np.asarray(jax.device_get(em16.astype(jnp.float32)))  # exact upcast
    for bi in range(B):
        got = pk16_np[bi][pk16_np[bi] >= 0]
        ref = _reference_kept_indices(em16_up[bi], 0)
        assert np.array_equal(got, ref)

    print("KERNEL_OK")
</pallas_src>

<mosaic_0001>
module attributes {stable_mosaic.version = 11 : i64} {
  func.func @_greedy_ctc_kernel(%arg0: i32, %arg1: i32, %arg2: memref<1x40x32xf32, #tpu.memory_space<vmem>>, %arg3: memref<1x1x40xi32, #tpu.memory_space<vmem>>, %arg4: memref<1x1xi32, #tpu.memory_space<vmem>>) attributes {dimension_semantics = [#tpu.dimension_semantics<parallel>, #tpu.dimension_semantics<arbitrary>], iteration_bounds = array<i64: 2, 1>, scalar_prefetch = 0 : i64, scratch_operands = 1 : i64, tpu.core_type = #tpu.core_type<tc>, window_params = [{transform_indices = @transform_0, window_bounds = array<i64: 1, 40, 32>}, {transform_indices = @transform_1, window_bounds = array<i64: 1, 1, 40>}]} {
    %c0 = arith.constant 0 : index
    %c0_0 = arith.constant 0 : index
    %c0_1 = arith.constant 0 : index
    %0 = vector.load %arg2[%c0, %c0_0, %c0_1] : memref<1x40x32xf32, #tpu.memory_space<vmem>>, vector<1x40x32xf32>
    %1 = vector.shape_cast %0 : vector<1x40x32xf32> to vector<40x32xf32>
    %2 = tpu.iota {dimensions = array<i32: 1>} : vector<40x32xi32>
    %cst = arith.constant dense<0xFF800000> : vector<40xf32>
    %3 = vector.multi_reduction <maximumf>, %1, %cst [1] : vector<40x32xf32> to vector<40xf32>
    %4 = vector.shape_cast %3 : vector<40xf32> to vector<40x1xf32>
    %5 = vector.broadcast %4 : vector<40x1xf32> to vector<40x32xf32>
    %6 = arith.cmpf oeq, %1, %5 : vector<40x32xf32>
    %c32_i32 = arith.constant 32 : i32
    %7 = vector.broadcast %c32_i32 : i32 to vector<40x32xi32>
    %8 = arith.select %6, %2, %7 : vector<40x32xi1>, vector<40x32xi32>
    %cst_2 = arith.constant dense<2147483647> : vector<40xi32>
    %9 = vector.multi_reduction <minsi>, %8, %cst_2 [1] : vector<40x32xi32> to vector<40xi32>
    %10 = vector.shape_cast %9 : vector<40xi32> to vector<40x1xi32>
    %c31_i32 = arith.constant 31 : i32
    %11 = vector.broadcast %c31_i32 : i32 to vector<40x1xi32>
    %12 = arith.minsi %10, %11 : vector<40x1xi32>
    %c1_i32 = arith.constant 1 : i32
    %13 = tpu.dynamic_rotate %12 by %c1_i32 dim 0 : vector<40x1xi32>, i32 -> vector<40x1xi32>
    %c0_3 = arith.constant 0 : index
    %c0_4 = arith.constant 0 : index
    %14 = vector.load %arg4[%c0_3, %c0_4] : memref<1x1xi32, #tpu.memory_space<vmem>>, vector<1x1xi32>
    %c0_i32 = arith.constant 0 : i32
    %15 = arith.cmpi eq, %arg1, %c0_i32 : i32
    %c-1_i32 = arith.constant -1 : i32
    %16 = vector.broadcast %c-1_i32 : i32 to vector<1x1xi32>
    %17 = arith.select %15, %16, %14 : vector<1x1xi32>
    %18 = tpu.iota {dimensions = array<i32: 0>} : vector<40x1xi32>
    %c0_i32_5 = arith.constant 0 : i32
    %19 = vector.broadcast %c0_i32_5 : i32 to vector<40x1xi32>
    %20 = arith.cmpi eq, %18, %19 : vector<40x1xi32>
    %21 = vector.shape_cast %17 : vector<1x1xi32> to vector<1x1xi32>
    %22 = vector.broadcast %21 : vector<1x1xi32> to vector<40x1xi32>
    %23 = arith.select %20, %22, %13 : vector<40x1xi1>, vector<40x1xi32>
    %c40_i32 = arith.constant 40 : i32
    %24 = arith.muli %arg1, %c40_i32 : i32
    %25 = vector.broadcast %24 : i32 to vector<40x1xi32>
    %26 = arith.addi %25, %18 : vector<40x1xi32>
    %c40_i32_6 = arith.constant 40 : i32
    %27 = vector.broadcast %c40_i32_6 : i32 to vector<40x1xi32>
    %28 = arith.cmpi slt, %26, %27 : vector<40x1xi32>
    %29 = arith.cmpi ne, %12, %23 : vector<40x1xi32>
    %c0_i32_7 = arith.constant 0 : i32
    %30 = vector.broadcast %c0_i32_7 : i32 to vector<40x1xi32>
    %31 = arith.cmpi ne, %12, %30 : vector<40x1xi32>
    %32 = arith.andi %29, %31 : vector<40x1xi1>
    %33 = arith.andi %32, %28 : vector<40x1xi1>
    %c-1_i32_8 = arith.constant -1 : i32
    %34 = vector.broadcast %c-1_i32_8 : i32 to vector<40x1xi32>
    %35 = arith.select %33, %12, %34 : vector<40x1xi1>, vector<40x1xi32>
    %36 = vector.extract_strided_slice %12 {offsets = [39, 0], sizes = [1, 1], strides = [1, 1]} : vector<40x1xi32> to vector<1x1xi32>
    %c0_9 = arith.constant 0 : index
    %c0_10 = arith.constant 0 : index
    %37 = vector.load %arg4[%c0_9, %c0_10] : memref<1x1xi32, #tpu.memory_space<vmem>>, vector<1x1xi32>
    tpu.vector_store %arg4[%c0_9, %c0_10], %36 {strides = array<i32>} : memref<1x1xi32, #tpu.memory_space<vmem>>, vector<1x1xi32>,
    %38 = vector.shape_cast %35 : vector<40x1xi32> to vector<1x1x40xi32>
    %c0_11 = arith.constant 0 : index
    %c0_12 = arith.constant 0 : index
    %c0_13 = arith.constant 0 : index
    %39 = vector.load %arg3[%c0_11, %c0_12, %c0_13] : memref<1x1x40xi32, #tpu.memory_space<vmem>>, vector<1x1x40xi32>
    tpu.vector_store %arg3[%c0_11, %c0_12, %c0_13], %38 {strides = array<i32>} : memref<1x1x40xi32, #tpu.memory_space<vmem>>, vector<1x1x40xi32>,
    return
  }
  func.func @transform_0(%arg0: i32, %arg1: i32) -> (i32, i32, i32) {
    %c0_i32 = arith.constant 0 : i32
    %c0_i32_0 = arith.constant 0 : i32
    return %arg0, %arg1, %c0_i32 : i32, i32, i32
  }
  func.func @transform_1(%arg0: i32, %arg1: i32) -> (i32, i32, i32) {
    %c0_i32 = arith.constant 0 : i32
    %c0_i32_0 = arith.constant 0 : i32
    return %arg0, %c0_i32, %arg1 : i32, i32, i32
  }
}

module attributes {stable_mosaic.version = 11 : i64} {
  func.func @_greedy_ctc_kernel(%arg0: i32, %arg1: i32, %arg2: memref<1x40x32xf32, #tpu.memory_space<vmem>>, %arg3: memref<1x40x1xi32, #tpu.memory_space<vmem>>, %arg4: memref<1x1xi32, #tpu.memory_space<vmem>>) attributes {dimension_semantics = [#tpu.dimension_semantics<parallel>, #tpu.dimension_semantics<arbitrary>], iteration_bounds = array<i64: 2, 1>, scalar_prefetch = 0 : i64, scratch_operands = 1 : i64, tpu.core_type = #tpu.core_type<tc>, window_params = [{transform_indices = @transform_0, window_bounds = array<i64: 1, 40, 32>}, {transform_indices = @transform_1, window_bounds = array<i64: 1, 40, 1>}]} {
    %c0 = arith.constant 0 : index
    %c0_0 = arith.constant 0 : index
    %c0_1 = arith.constant 0 : index
    %0 = vector.load %arg2[%c0, %c0_0, %c0_1] : memref<1x40x32xf32, #tpu.memory_space<vmem>>, vector<1x40x32xf32>
    %1 = vector.shape_cast %0 : vector<1x40x32xf32> to vector<40x32xf32>
    %2 = tpu.iota {dimensions = array<i32: 1>} : vector<40x32xi32>
    %cst = arith.constant dense<0xFF800000> : vector<40xf32>
    %3 = vector.multi_reduction <maximumf>, %1, %cst [1] : vector<40x32xf32> to vector<40xf32>
    %4 = vector.shape_cast %3 : vector<40xf32> to vector<40x1xf32>
    %5 = vector.broadcast %4 : vector<40x1xf32> to vector<40x32xf32>
    %6 = arith.cmpf oeq, %1, %5 : vector<40x32xf32>
    %c32_i32 = arith.constant 32 : i32
    %7 = vector.broadcast %c32_i32 : i32 to vector<40x32xi32>
    %8 = arith.select %6, %2, %7 : vector<40x32xi1>, vector<40x32xi32>
    %cst_2 = arith.constant dense<2147483647> : vector<40xi32>
    %9 = vector.multi_reduction <minsi>, %8, %cst_2 [1] : vector<40x32xi32> to vector<40xi32>
    %10 = vector.shape_cast %9 : vector<40xi32> to vector<40x1xi32>
    %c31_i32 = arith.constant 31 : i32
    %11 = vector.broadcast %c31_i32 : i32 to vector<40x1xi32>
    %12 = arith.minsi %10, %11 : vector<40x1xi32>
    %c1_i32 = arith.constant 1 : i32
    %13 = tpu.dynamic_rotate %12 by %c1_i32 dim 0 : vector<40x1xi32>, i32 -> vector<40x1xi32>
    %c0_3 = arith.constant 0 : index
    %c0_4 = arith.constant 0 : index
    %14 = vector.load %arg4[%c0_3, %c0_4] : memref<1x1xi32, #tpu.memory_space<vmem>>, vector<1x1xi32>
    %c0_i32 = arith.constant 0 : i32
    %15 = arith.cmpi eq, %arg1, %c0_i32 : i32
    %c-1_i32 = arith.constant -1 : i32
    %16 = vector.broadcast %c-1_i32 : i32 to vector<1x1xi32>
    %17 = arith.select %15, %16, %14 : vector<1x1xi32>
    %18 = tpu.iota {dimensions = array<i32: 0>} : vector<40x1xi32>
    %c0_i32_5 = arith.constant 0 : i32
    %19 = vector.broadcast %c0_i32_5 : i32 to vector<40x1xi32>
    %20 = arith.cmpi eq, %18, %19 : vector<40x1xi32>
    %21 = vector.shape_cast %17 : vector<1x1xi32> to vector<1x1xi32>
    %22 = vector.broadcast %21 : vector<1x1xi32> to vector<40x1xi32>
    %23 = arith.select %20, %22, %13 : vector<40x1xi1>, vector<40x1xi32>
    %c40_i32 = arith.constant 40 : i32
    %24 = arith.muli %arg1, %c40_i32 : i32
    %25 = vector.broadcast %24 : i32 to vector<40x1xi32>
    %26 = arith.addi %25, %18 : vector<40x1xi32>
    %c40_i32_6 = arith.constant 40 : i32
    %27 = vector.broadcast %c40_i32_6 : i32 to vector<40x1xi32>
    %28 = arith.cmpi slt, %26, %27 : vector<40x1xi32>
    %29 = arith.cmpi ne, %12, %23 : vector<40x1xi32>
    %c0_i32_7 = arith.constant 0 : i32
    %30 = vector.broadcast %c0_i32_7 : i32 to vector<40x1xi32>
    %31 = arith.cmpi ne, %12, %30 : vector<40x1xi32>
    %32 = arith.andi %29, %31 : vector<40x1xi1>
    %33 = arith.andi %32, %28 : vector<40x1xi1>
    %c-1_i32_8 = arith.constant -1 : i32
    %34 = vector.broadcast %c-1_i32_8 : i32 to vector<40x1xi32>
    %35 = arith.select %33, %12, %34 : vector<40x1xi1>, vector<40x1xi32>
    %36 = vector.extract_strided_slice %12 {offsets = [39, 0], sizes = [1, 1], strides = [1, 1]} : vector<40x1xi32> to vector<1x1xi32>
    %c0_9 = arith.constant 0 : index
    %c0_10 = arith.constant 0 : index
    %37 = vector.load %arg4[%c0_9, %c0_10] : memref<1x1xi32, #tpu.memory_space<vmem>>, vector<1x1xi32>
    tpu.vector_store %arg4[%c0_9, %c0_10], %36 {strides = array<i32>} : memref<1x1xi32, #tpu.memory_space<vmem>>, vector<1x1xi32>,
    %38 = vector.shape_cast %35 : vector<40x1xi32> to vector<1x40x1xi32>
    %c0_11 = arith.constant 0 : index
    %c0_12 = arith.constant 0 : index
    %c0_13 = arith.constant 0 : index
    %39 = vector.load %arg3[%c0_11, %c0_12, %c0_13] : memref<1x40x1xi32, #tpu.memory_space<vmem>>, vector<1x40x1xi32>
    tpu.vector_store %arg3[%c0_11, %c0_12, %c0_13], %38 {strides = array<i32>} : memref<1x40x1xi32, #tpu.memory_space<vmem>>, vector<1x40x1xi32>,
    return
  }
  func.func @transform_0(%arg0: i32, %arg1: i32) -> (i32, i32, i32) {
    %c0_i32 = arith.constant 0 : i32
    %c0_i32_0 = arith.constant 0 : i32
    return %arg0, %arg1, %c0_i32 : i32, i32, i32
  }
  func.func @transform_1(%arg0: i32, %arg1: i32) -> (i32, i32, i32) {
    %c0_i32 = arith.constant 0 : i32
    %c0_i32_0 = arith.constant 0 : i32
    return %arg0, %arg1, %c0_i32 : i32, i32, i32
  }
}

</mosaic_0001>

<llo_original>
// kernel: tpu_custom_call.1
$region0: #{tpu_custom_call.1}
  #allocation0 [shape = 'u32[]', space=smem, size = 0x4, offset = 0x4, fixed_abs, tag = 'smem constant byte address 0x4 - core index']
  #allocation1 [shape = 'u32[144,128]{1,0:T(1,128)}', space=vmem, size = 0x12000, scoped, tag = 'internal scratch']
  #allocation2 [shape = 's32[1,1]{1,0:T(1,128)}', space=vmem, size = 0x200, scoped, tag = 'scratch operand']
  %s0 = inlined_call_operand.vmem [shape: f32[2,40,32], index: 0, kind: input, shape index: {}]
  %s1 = inlined_call_operand.hbm [shape: s32[2,1,40], index: 1, kind: output, shape index: {}]
  %s2 = sld [smem:[#allocation0]]
  $region37: #{tpu_custom_call.1} parent=0
    _
  %s4 = ssub.s32 1, %s2
  %s5 = scalar_select 0, %s4, %s2
  $region1: #{tpu_custom_call.1} parent=0
    #allocation3 [shape = 'u8[1024]{0}', space=vmem, size = 0x400, scoped, tag = 'output window, operand 0']
    #allocation4 [shape = 's32[2]{0}', space=sflag, size = 0x8, scoped, tag = 'scoped memory for tpu_custom_call.1']
    %6 = vsyncpa [#allocation4], 0
    %s7 = scalar_lea.sflag [#allocation4], 1
    %8 = vsyncpa %s7, 0
    loop: start=0, step=1, limit=4
    $region2: #{tpu_custom_call.1} parent=1 // loop_pre_header
      _
    $region3: #{tpu_custom_call.1} parent=1 // loop_header
      %s10 = sphi 0, %s14
      %p11 = scmp.ge.s32.totalorder %s10, 4
      %s17 = sphi 0, %s29
      %s18 = sphi 0, %s25
      %s19 = sphi 0, %s17
      %s20 = sphi 0, %s18
      %s21 = sphi 0, %s19
      %s22 = sphi 0, %s20
      %s34 = sphi 0, %s36
      %s37 = sphi 0, %s34
      %s38 = sphi 0, %s37
      %s54 = sphi 0, %s38
      %s62 = sphi 0, %s64
      %s65 = sphi 0, %s62
      %s66 = sphi 0, %s65
      %s82 = sphi 0, %s66
    $region4: #{tpu_custom_call.1} parent=1 // loop_header_branch
      %13 = sbr.rel (%p11) target = $region8
    $region5: #{tpu_custom_call.1} parent=1 // loop_body
      %s15 = ssub.s32 %s10, 1
      %s16 = ssub.s32 %s10, 2
      %s23 = sadd.s32 1, %s18
      %p24 = scmp.ge.s32.totalorder %s23, 1
      %s25 = scalar_select %p24, 0, %s23
      %s26 = sadd.s32 1, %s17
      %s27 = scalar_select %p24, %s26, %s17
      %p28 = scmp.ge.s32.totalorder %s27, 2
      %s29 = scalar_select %p28, 0, %s27
      %s30 = ssub.s32 %s17, %s29
      %s31 = ssub.s32 %s18, %s25
      %s32 = sor.u32 %s30, %s31
      %p33 = scmp.eq.s32.totalorder %s32, 0
      %s35 = sadd.s32 %s34, 1
      %s36 = scalar_select %p33, %s34, %s35
      %p39 = pneg %p33
      %p40 = scmp.eq.s32.totalorder %s10, 1
      %p41 = por %p39, %p40
      %p42 = scmp.ne.s32.totalorder %s34, %s37
      %p43 = scmp.eq.s32.totalorder %s10, 0
      %p44 = por %p42, %p43
      %p45 = scmp.ne.s32.totalorder %s34, %s37
      %p46 = scmp.eq.s32.totalorder %s15, 1
      %p47 = por %p45, %p46
      %p48 = scmp.ne.s32.totalorder %s37, %s38
      %p49 = scmp.eq.s32.totalorder %s15, 0
      %p50 = por %p48, %p49
      %p51 = scmp.ne.s32.totalorder %s37, %s38
      %p52 = scmp.eq.s32.totalorder %s16, 1
      %p53 = por %p51, %p52
      %p55 = scmp.ne.s32.totalorder %s38, %s54
      %p56 = scmp.eq.s32.totalorder %s16, 0
      %p57 = por %p55, %p56
      %s58 = ssub.s32 %s17, %s29
      %s59 = ssub.s32 %s18, %s25
      %s60 = sor.u32 %s58, %s59
      %p61 = scmp.eq.s32.totalorder %s60, 0
      %s63 = sadd.s32 %s62, 1
      %s64 = scalar_select %p61, %s62, %s63
      %p67 = pneg %p61
      %p68 = scmp.eq.s32.totalorder %s10, 1
      %p69 = por %p67, %p68
      %p70 = scmp.ne.s32.totalorder %s62, %s65
      %p71 = scmp.eq.s32.totalorder %s10, 0
      %p72 = por %p70, %p71
      %p73 = scmp.ne.s32.totalorder %s62, %s65
      %p74 = scmp.eq.s32.totalorder %s15, 1
      %p75 = por %p73, %p74
      %p76 = scmp.ne.s32.totalorder %s65, %s66
      %p77 = scmp.eq.s32.totalorder %s15, 0
      %p78 = por %p76, %p77
      %p79 = scmp.ne.s32.totalorder %s65, %s66
      %p80 = scmp.eq.s32.totalorder %s16, 1
      %p81 = por %p79, %p80
      %p83 = scmp.ne.s32.totalorder %s66, %s82
      %p84 = scmp.eq.s32.totalorder %s16, 0
      %p85 = por %p83, %p84
      %p86 = scmp.le.s32.totalorder 1, %s10
      %p87 = scmp.lt.s32.totalorder %s10, 3
      %p88 = pnand %p86, %p87
      %p89 = pneg %p88
      // Predicated region
      $region9: #{tpu_custom_call.1} parent=5 // pred_check
        _
      $region10: #{tpu_custom_call.1} parent=5 // pred_check_branch
        %91 = sbr.rel (%p88) target = $region12
      $region11: #{tpu_custom_call.1} parent=5 // pred_region
        %s92 = ssub.s32 %s10, 1
      $region12: #{tpu_custom_call.1} parent=5 // pred_fallthru
        _
      %p93 = scmp.lt.s32.totalorder %s10, 2
      // Predicated region
      $region13: #{tpu_custom_call.1} parent=5 // pred_check
        %p94 = pneg %p93
      $region14: #{tpu_custom_call.1} parent=5 // pred_check_branch
        %96 = sbr.rel (%p94) target = $region16
      $region15: #{tpu_custom_call.1} parent=5 // pred_region
        // Predicated region
        $region17: #{tpu_custom_call.1} parent=15 // pred_check
          %p97 = pneg %p44
        $region18: #{tpu_custom_call.1} parent=15 // pred_check_branch
          %99 = sbr.rel (%p97) target = $region20
        $region19: #{tpu_custom_call.1} parent=15 // pred_region
          %s100 = smul.u32 5, %s18
          %p101 = scmp.lt.s32.totalorder %s17, 1
          %s102 = scalar_select %p101, %s17, 1
          %p103 = scmp.lt.s32.totalorder %s100, 4
          %s104 = scalar_select %p103, %s100, 4
          %s105 = smul.addr %s102, 5
          %s106 = sadd.s32 %s104, %s105
          %s107 = smul.addr %s106, 8
          %s108 = scalar_lea.vmem %s0, %s107
          %s109 = smul.u32 5, %s18
        $region20: #{tpu_custom_call.1} parent=15 // pred_fallthru
          _
      $region16: #{tpu_custom_call.1} parent=5 // pred_fallthru
        _
      %p110 = scmp.le.s32.totalorder 1, %s10
      %p111 = scmp.lt.s32.totalorder %s10, 3
      %p112 = pnand %p110, %p111
      %p113 = pneg %p112
      // Predicated region
      $region21: #{tpu_custom_call.1} parent=5 // pred_check
        _
      $region22: #{tpu_custom_call.1} parent=5 // pred_check_branch
        %115 = sbr.rel (%p112) target = $region24
      $region23: #{tpu_custom_call.1} parent=5 // pred_region
        %s116 = ssub.s32 %s10, 1
        %s117 = smul.u32 5, %s20
        %p118 = scmp.lt.s32.totalorder %s19, 1
        %s119 = scalar_select %p118, %s19, 1
        %p120 = scmp.lt.s32.totalorder %s117, 4
        %s121 = scalar_select %p120, %s117, 4
        %s122 = smul.addr %s119, 5
        %s123 = sadd.s32 %s121, %s122
        %s124 = smul.addr %s123, 8
        %s125 = scalar_lea.vmem %s0, %s124
        %p126 = pneg %p50
        %p127 = pneg %p47
        %p128 = pneg %p78
        %p129 = pneg %p75
        %s130 = sand.u32 %s65, 1
        %s131 = scalar_lea.sflag [#allocation4], %s130
        %s132 = sand.u32 %s65, 1
        %s133 = scalar_lea.vmem [#allocation3], %s132
        %s134 = smul.u32 5, %s20
        %p135 = scmp.lt.s32.totalorder %s19, 1
        %s136 = scalar_select %p135, %s19, 1
        %p137 = scmp.lt.s32.totalorder %s134, 4
        %s138 = scalar_select %p137, %s134, 4
        %s139 = smul.addr %s136, 5
        %s140 = sadd.s32 %s138, %s139
        %s141 = smul.addr %s140, 8
        %s142 = scalar_lea.vmem %s0, %s141
        %s143 = smul.u32 5, %s20
        %v144 = vld [vmem:[%s142] sm:$0xff]
        %v145 = vld [vmem:[%s142 + $0x8] sm:$0xff]
        %v146 = vld [vmem:[%s142 + $0x10] sm:$0xff]
        %v147 = vld [vmem:[%s142 + $0x18] sm:$0xff]
        %v148 = vld [vmem:[%s142 + $0x20] sm:$0xff]
        %v149 = vlaneseq
        %v150 = vand.u32 %v149, 127
        %vm151 = vcmask 261120
        %v152 = vsel %vm151, %v144, -inf
        %153 = vmax.xlane.f32.xlu0 %v152
        %v154 = vpop.xlane.xlu0 %153
        %v155 = vsel %vm151, %v145, -inf
        %156 = vmax.xlane.f32.xlu0 %v155
        %v157 = vpop.xlane.xlu0 %156
        %v158 = vsel %vm151, %v146, -inf
        %159 = vmax.xlane.f32.xlu0 %v158
        %v160 = vpop.xlane.xlu0 %159
        %v161 = vsel %vm151, %v147, -inf
        %162 = vmax.xlane.f32.xlu0 %v161
        %v163 = vpop.xlane.xlu0 %162
        %v164 = vsel %vm151, %v148, -inf
        %165 = vmax.xlane.f32.xlu0 %v164
        %v166 = vpop.xlane.xlu0 %165
        %vm167 = vcmp.eq.f32.partialorder %v144, %v154
        %vm168 = vcmp.eq.f32.partialorder %v145, %v157
        %vm169 = vcmp.eq.f32.partialorder %v146, %v160
        %vm170 = vcmp.eq.f32.partialorder %v147, %v163
        %vm171 = vcmp.eq.f32.partialorder %v148, %v166
        %v172 = vsel %vm167, %v150, 32
        %v173 = vsel %vm168, %v150, 32
        %v174 = vsel %vm169, %v150, 32
        %v175 = vsel %vm170, %v150, 32
        %v176 = vsel %vm171, %v150, 32
        %v177 = vsel %vm151, %v172, 2147483647
        %v178 = vand.u32 %v177, 65535
        %v179 = vshra.s32 %v177, 16
        %v180 = vcvt.s32.f32 %v178
        %v181 = vcvt.s32.f32 %v179
        %182 = vmin.xlane.f32.xlu0 %v181
        %v183 = vpop.xlane.xlu0 %182
        %vm184 = vcmp.eq.f32.partialorder %v181, %v183
        %v185 = vsel %vm184, %v180, inf
        %186 = vmin.xlane.f32.xlu0 %v185
        %v187 = vpop.xlane.xlu0 %186
        %v188 = vcvt.f32.s32 %v187
        %v189 = vcvt.f32.s32 %v183
        %v190 = vshll.u32 %v189, 16
        %v191 = vadd.s32 %v190, %v188
        %v192 = vsel %vm151, %v173, 2147483647
        %v193 = vand.u32 %v192, 65535
        %v194 = vshra.s32 %v192, 16
        %v195 = vcvt.s32.f32 %v193
        %v196 = vcvt.s32.f32 %v194
        %197 = vmin.xlane.f32.xlu0 %v196
        %v198 = vpop.xlane.xlu0 %197
        %vm199 = vcmp.eq.f32.partialorder %v196, %v198
        %v200 = vsel %vm199, %v195, inf
        %201 = vmin.xlane.f32.xlu0 %v200
        %v202 = vpop.xlane.xlu0 %201
        %v203 = vcvt.f32.s32 %v202
        %v204 = vcvt.f32.s32 %v198
        %v205 = vshll.u32 %v204, 16
        %v206 = vadd.s32 %v205, %v203
        %v207 = vsel %vm151, %v174, 2147483647
        %v208 = vand.u32 %v207, 65535
        %v209 = vshra.s32 %v207, 16
        %v210 = vcvt.s32.f32 %v208
        %v211 = vcvt.s32.f32 %v209
        %212 = vmin.xlane.f32.xlu0 %v211
        %v213 = vpop.xlane.xlu0 %212
        %vm214 = vcmp.eq.f32.partialorder %v211, %v213
        %v215 = vsel %vm214, %v210, inf
        %216 = vmin.xlane.f32.xlu0 %v215
        %v217 = vpop.xlane.xlu0 %216
        %v218 = vcvt.f32.s32 %v217
        %v219 = vcvt.f32.s32 %v213
        %v220 = vshll.u32 %v219, 16
        %v221 = vadd.s32 %v220, %v218
        %v222 = vsel %vm151, %v175, 2147483647
        %v223 = vand.u32 %v222, 65535
        %v224 = vshra.s32 %v222, 16
        %v225 = vcvt.s32.f32 %v223
        %v226 = vcvt.s32.f32 %v224
        %227 = vmin.xlane.f32.xlu0 %v226
        %v228 = vpop.xlane.xlu0 %227
        %vm229 = vcmp.eq.f32.partialorder %v226, %v228
        %v230 = vsel %vm229, %v225, inf
        %231 = vmin.xlane.f32.xlu0 %v230
        %v232 = vpop.xlane.xlu0 %231
        %v233 = vcvt.f32.s32 %v232
        %v234 = vcvt.f32.s32 %v228
        %v235 = vshll.u32 %v234, 16
        %v236 = vadd.s32 %v235, %v233
        %v237 = vsel %vm151, %v176, 2147483647
        %v238 = vand.u32 %v237, 65535
        %v239 = vshra.s32 %v237, 16
        %v240 = vcvt.s32.f32 %v238
        %v241 = vcvt.s32.f32 %v239
        %242 = vmin.xlane.f32.xlu0 %v241
        %v243 = vpop.xlane.xlu0 %242
        %vm244 = vcmp.eq.f32.partialorder %v241, %v243
        %v245 = vsel %vm244, %v240, inf
        %246 = vmin.xlane.f32.xlu0 %v245
        %v247 = vpop.xlane.xlu0 %246
        %v248 = vcvt.f32.s32 %v247
        %v249 = vcvt.f32.s32 %v243
        %v250 = vshll.u32 %v249, 16
        %v251 = vadd.s32 %v250, %v248
        %vm252 = vcmp.lt.s32.totalorder %v191, 31
        %v253 = vsel %vm252, %v191, 31
        %vm254 = vcmp.lt.s32.totalorder %v206, 31
        %v255 = vsel %vm254, %v206, 31
        %vm256 = vcmp.lt.s32.totalorder %v221, 31
        %v257 = vsel %vm256, %v221, 31
        %vm258 = vcmp.lt.s32.totalorder %v236, 31
        %v259 = vsel %vm258, %v236, 31
        %vm260 = vcmp.lt.s32.totalorder %v251, 31
        %v261 = vsel %vm260, %v251, 31
        %v262 = vrot.slane %v253, 7
        %v263 = vrot.slane %v255, 7
        %v264 = vrot.slane %v257, 7
        %v265 = vrot.slane %v259, 7
        %v266 = vrot.slane %v261, 7
        %v267 = vlaneseq
        %v268 = vshrl.u32 %v267, 7
        %vm269 = vcmp.lt.s32.totalorder %v268, 1
        %v270 = vsel %vm269, %v265, %v266
        %v271 = vsel %vm269, %v264, %v265
        %v272 = vsel %vm269, %v263, %v264
        %v273 = vsel %vm269, %v262, %v263
        %v274 = vsel %vm269, %v266, %v262
        %v275 = vld [vmem:[#allocation2] sm:$0x1]
        %p276 = scmp.eq.s32.totalorder %s20, 0
        %s277 = scalar_select %p276, 1, 0
        %v278 = vstv %s277
        %vm279 = vcmp.eq.s32.totalorder %v278, 1
        %v280 = vsel %vm279, 4294967295, %v275
        %v281 = vadd.s32 %v268, 8
        %v282 = vadd.s32 %v268, 16
        %v283 = vadd.s32 %v268, 24
        %v284 = vadd.s32 %v268, 32
        %vm285 = vcmp.eq.s32.totalorder %v268, 0
        %vm286 = vcmp.eq.s32.totalorder %v281, 0
        %vm287 = vcmp.eq.s32.totalorder %v282, 0
        %vm288 = vcmp.eq.s32.totalorder %v283, 0
        %vm289 = vcmp.eq.s32.totalorder %v284, 0
        %v290 = vlaneseq
        %v291 = vshrl.u32 %v290, 7
        %v292 = vsub.s32 0, %v291
        %v293 = vrot.slane %v280, %v292
        %v294 = vsel %vm285, %v293, %v274
        %v295 = vsel %vm286, %v293, %v273
        %v296 = vsel %vm287, %v293, %v272
        %v297 = vsel %vm288, %v293, %v271
        %v298 = vsel %vm289, %v293, %v270
        %s299 = smul.u32 %s20, 40
        %v300 = vstv %s299
        %v301 = vadd.s32 %v300, %v268
        %v302 = vadd.s32 %v300, %v281
        %v303 = vadd.s32 %v300, %v282
        %v304 = vadd.s32 %v300, %v283
        %v305 = vadd.s32 %v300, %v284
        %vm306 = vcmp.lt.s32.totalorder %v301, 40
        %vm307 = vcmp.lt.s32.totalorder %v302, 40
        %vm308 = vcmp.lt.s32.totalorder %v303, 40
        %vm309 = vcmp.lt.s32.totalorder %v304, 40
        %vm310 = vcmp.lt.s32.totalorder %v305, 40
        %vm311 = vcmp.ne.s32.totalorder %v253, %v294
        %vm312 = vcmp.ne.s32.totalorder %v255, %v295
        %vm313 = vcmp.ne.s32.totalorder %v257, %v296
        %vm314 = vcmp.ne.s32.totalorder %v259, %v297
        %vm315 = vcmp.ne.s32.totalorder %v261, %v298
        %vm316 = vcmp.ne.s32.totalorder %v253, 0
        %vm317 = vcmp.ne.s32.totalorder %v255, 0
        %vm318 = vcmp.ne.s32.totalorder %v257, 0
        %vm319 = vcmp.ne.s32.totalorder %v259, 0
        %vm320 = vcmp.ne.s32.totalorder %v261, 0
        %vm321 = vmand %vm311, %vm316
        %vm322 = vmand %vm312, %vm317
        %vm323 = vmand %vm313, %vm318
        %vm324 = vmand %vm314, %vm319
        %vm325 = vmand %vm315, %vm320
        %vm326 = vmand %vm321, %vm306
        %vm327 = vmand %vm322, %vm307
        %vm328 = vmand %vm323, %vm308
        %vm329 = vmand %vm324, %vm309
        %vm330 = vmand %vm325, %vm310
        %v331 = vsel %vm326, %v253, 4294967295
        %v332 = vsel %vm327, %v255, 4294967295
        %v333 = vsel %vm328, %v257, 4294967295
        %v334 = vsel %vm329, %v259, 4294967295
        %v335 = vsel %vm330, %v261, 4294967295
        %vm336 = vcmask 7175
        %337 = vst.msk [vmem:[#allocation2 - $0x7] sm:$0x80] %vm336, %v261
        %338 = vset.pattern.permute.xlu0 0
        %339 = vperm.xlu0 %338, %v331
        %v340 = vpop.permute.xlu0 %339
        %341 = vset.pattern.permute.xlu0 0
        %342 = vperm.xlu0 %341, %v332
        %v343 = vpop.permute.xlu0 %342
        %344 = vset.pattern.permute.xlu0 0
        %345 = vperm.xlu0 %344, %v333
        %v346 = vpop.permute.xlu0 %345
        %347 = vset.pattern.permute.xlu0 0
        %348 = vperm.xlu0 %347, %v334
        %v349 = vpop.permute.xlu0 %348
        %350 = vset.pattern.permute.xlu0 0
        %351 = vperm.xlu0 %350, %v335
        %v352 = vpop.permute.xlu0 %351
        %v353 = vlaneseq
        %v354 = vshrl.u32 %v353, 7
        %v355 = vsub.s32 %v150, %v354
        %v356 = vrot.slane %v340, %v355
        %v357 = vadd.s32 %v150, 4294967288
        %v358 = vlaneseq
        %v359 = vshrl.u32 %v358, 7
        %v360 = vsub.s32 %v357, %v359
        %v361 = vrot.slane %v343, %v360
        %vm362 = vcmask 130112
        %v363 = vsel %vm362, %v361, %v356
        %v364 = vadd.s32 %v150, 4294967280
        %v365 = vlaneseq
        %v366 = vshrl.u32 %v365, 7
        %v367 = vsub.s32 %v364, %v366
        %v368 = vrot.slane %v346, %v367
        %vm369 = vcmask 195712
        %v370 = vsel %vm369, %v368, %v363
        %v371 = vadd.s32 %v150, 4294967272
        %v372 = vlaneseq
        %v373 = vshrl.u32 %v372, 7
        %v374 = vsub.s32 %v371, %v373
        %v375 = vrot.slane %v349, %v374
        %vm376 = vcmask 261312
        %v377 = vsel %vm376, %v375, %v370
        %v378 = vadd.s32 %v150, 4294967264
        %v379 = vlaneseq
        %v380 = vshrl.u32 %v379, 7
        %v381 = vsub.s32 %v378, %v380
        %v382 = vrot.slane %v352, %v381
        %vm383 = vcmask 326912
        %v384 = vsel %vm383, %v382, %v377
        %vm385 = vcmask 319488
        %386 = vst.msk [vmem:[%s133] sm:$0x1] %vm385, %v384
        %s387 = sand.u32 %s65, 1
        %s388 = scalar_lea.sflag [#allocation4], %s387
        %s389 = sand.u32 %s65, 1
        %s390 = scalar_lea.vmem [#allocation3], %s389
        // Predicated region
        $region25: #{tpu_custom_call.1} parent=23 // pred_check
          %p391 = pneg %p75
        $region26: #{tpu_custom_call.1} parent=23 // pred_check_branch
          %393 = sbr.rel (%p391) target = $region28
        $region27: #{tpu_custom_call.1} parent=23 // pred_region
          %s395 = ssub.s32 16, 16
          %396 = vsyncadd %s388, %s395
          %s397 = sadd.s32 %s20, %s19
          %s398 = smul.addr %s397, 16
          %s399 = scalar_lea.hbm %s1, %s398
          %s401 = sshll.u32 %s390, 4
          %s402 = int_to_ptr.vmem [resolvable:$true] %s401
          %404 = dma.vmem_to_hbm [thread:$0]  %s402, 16, %s399, %s388
        $region28: #{tpu_custom_call.1} parent=23 // pred_fallthru
          _
      $region24: #{tpu_custom_call.1} parent=5 // pred_fallthru
        _
      %p405 = scmp.le.s32.totalorder 2, %s10
      // Predicated region
      $region29: #{tpu_custom_call.1} parent=5 // pred_check
        %p406 = pneg %p405
      $region30: #{tpu_custom_call.1} parent=5 // pred_check_branch
        %408 = sbr.rel (%p406) target = $region32
      $region31: #{tpu_custom_call.1} parent=5 // pred_region
        %s409 = ssub.s32 %s10, 2
        // Predicated region
        $region33: #{tpu_custom_call.1} parent=31 // pred_check
          %p410 = pneg %p81
        $region34: #{tpu_custom_call.1} parent=31 // pred_check_branch
          %412 = sbr.rel (%p410) target = $region36
        $region35: #{tpu_custom_call.1} parent=31 // pred_region
          %s413 = sand.u32 %s66, 1
          %s414 = scalar_lea.sflag [#allocation4], %s413
          %s415 = sand.u32 %s66, 1
          %s416 = scalar_lea.vmem [#allocation3], %s415
          %417 = dma.done %s414, 16
        $region36: #{tpu_custom_call.1} parent=31 // pred_fallthru
          _
      $region32: #{tpu_custom_call.1} parent=5 // pred_fallthru
        _
    $region6: #{tpu_custom_call.1} parent=1 // loop_footer
      %s14 = sadd.s32 1, %s10
    $region7: #{tpu_custom_call.1} parent=1 // loop_footer_branch
      %9 = sbr.rel target = $region3
    $region8: #{tpu_custom_call.1} parent=1 // loop_exit
      _
    %418 = vsyncpa [#allocation4], 1
    %s419 = scalar_lea.sflag [#allocation4], 1
    %420 = vsyncpa %s419, 1

// kernel: tpu_custom_call.1
$region0: #{tpu_custom_call.1}
  #allocation0 [shape = 'u32[]', space=smem, size = 0x4, offset = 0x4, fixed_abs, tag = 'smem constant byte address 0x4 - core index']
  #allocation1 [shape = 'u32[144,128]{1,0:T(1,128)}', space=vmem, size = 0x12000, scoped, tag = 'internal scratch']
  #allocation2 [shape = 's32[1,1]{1,0:T(1,128)}', space=vmem, size = 0x200, scoped, tag = 'scratch operand']
  %s0 = inlined_call_operand.vmem [shape: f32[2,40,32], index: 0, kind: input, shape index: {}]
  %s1 = inlined_call_operand.vmem [shape: s32[2,40,1], index: 1, kind: output, shape index: {}]
  %s2 = sld [smem:[#allocation0]]
  $region37: #{tpu_custom_call.1} parent=0
    _
  %s4 = ssub.s32 1, %s2
  %s5 = scalar_select 0, %s4, %s2
  loop: start=0, step=1, limit=4
  $region2: #{tpu_custom_call.1} parent=0 // loop_pre_header
    _
  $region3: #{tpu_custom_call.1} parent=0 // loop_header
    %s7 = sphi 0, %s11
    %p8 = scmp.ge.s32.totalorder %s7, 4
    %s14 = sphi 0, %s26
    %s15 = sphi 0, %s22
    %s16 = sphi 0, %s14
    %s17 = sphi 0, %s15
    %s18 = sphi 0, %s16
    %s19 = sphi 0, %s17
    %s31 = sphi 0, %s33
    %s34 = sphi 0, %s31
    %s35 = sphi 0, %s34
    %s51 = sphi 0, %s35
    %s59 = sphi 0, %s61
    %s62 = sphi 0, %s59
    %s63 = sphi 0, %s62
    %s79 = sphi 0, %s63
  $region4: #{tpu_custom_call.1} parent=0 // loop_header_branch
    %10 = sbr.rel (%p8) target = $region8
  $region5: #{tpu_custom_call.1} parent=0 // loop_body
    %s12 = ssub.s32 %s7, 1
    %s13 = ssub.s32 %s7, 2
    %s20 = sadd.s32 1, %s15
    %p21 = scmp.ge.s32.totalorder %s20, 1
    %s22 = scalar_select %p21, 0, %s20
    %s23 = sadd.s32 1, %s14
    %s24 = scalar_select %p21, %s23, %s14
    %p25 = scmp.ge.s32.totalorder %s24, 2
    %s26 = scalar_select %p25, 0, %s24
    %s27 = ssub.s32 %s14, %s26
    %s28 = ssub.s32 %s15, %s22
    %s29 = sor.u32 %s27, %s28
    %p30 = scmp.eq.s32.totalorder %s29, 0
    %s32 = sadd.s32 %s31, 1
    %s33 = scalar_select %p30, %s31, %s32
    %p36 = pneg %p30
    %p37 = scmp.eq.s32.totalorder %s7, 1
    %p38 = por %p36, %p37
    %p39 = scmp.ne.s32.totalorder %s31, %s34
    %p40 = scmp.eq.s32.totalorder %s7, 0
    %p41 = por %p39, %p40
    %p42 = scmp.ne.s32.totalorder %s31, %s34
    %p43 = scmp.eq.s32.totalorder %s12, 1
    %p44 = por %p42, %p43
    %p45 = scmp.ne.s32.totalorder %s34, %s35
    %p46 = scmp.eq.s32.totalorder %s12, 0
    %p47 = por %p45, %p46
    %p48 = scmp.ne.s32.totalorder %s34, %s35
    %p49 = scmp.eq.s32.totalorder %s13, 1
    %p50 = por %p48, %p49
    %p52 = scmp.ne.s32.totalorder %s35, %s51
    %p53 = scmp.eq.s32.totalorder %s13, 0
    %p54 = por %p52, %p53
    %s55 = ssub.s32 %s14, %s26
    %s56 = ssub.s32 %s15, %s22
    %s57 = sor.u32 %s55, %s56
    %p58 = scmp.eq.s32.totalorder %s57, 0
    %s60 = sadd.s32 %s59, 1
    %s61 = scalar_select %p58, %s59, %s60
    %p64 = pneg %p58
    %p65 = scmp.eq.s32.totalorder %s7, 1
    %p66 = por %p64, %p65
    %p67 = scmp.ne.s32.totalorder %s59, %s62
    %p68 = scmp.eq.s32.totalorder %s7, 0
    %p69 = por %p67, %p68
    %p70 = scmp.ne.s32.totalorder %s59, %s62
    %p71 = scmp.eq.s32.totalorder %s12, 1
    %p72 = por %p70, %p71
    %p73 = scmp.ne.s32.totalorder %s62, %s63
    %p74 = scmp.eq.s32.totalorder %s12, 0
    %p75 = por %p73, %p74
    %p76 = scmp.ne.s32.totalorder %s62, %s63
    %p77 = scmp.eq.s32.totalorder %s13, 1
    %p78 = por %p76, %p77
    %p80 = scmp.ne.s32.totalorder %s63, %s79
    %p81 = scmp.eq.s32.totalorder %s13, 0
    %p82 = por %p80, %p81
    %p83 = scmp.le.s32.totalorder 1, %s7
    %p84 = scmp.lt.s32.totalorder %s7, 3
    %p85 = pnand %p83, %p84
    %p86 = pneg %p85
    // Predicated region
    $region9: #{tpu_custom_call.1} parent=5 // pred_check
      _
    $region10: #{tpu_custom_call.1} parent=5 // pred_check_branch
      %88 = sbr.rel (%p85) target = $region12
    $region11: #{tpu_custom_call.1} parent=5 // pred_region
      %s89 = ssub.s32 %s7, 1
    $region12: #{tpu_custom_call.1} parent=5 // pred_fallthru
      _
    %p90 = scmp.lt.s32.totalorder %s7, 2
    // Predicated region
    $region13: #{tpu_custom_call.1} parent=5 // pred_check
      %p91 = pneg %p90
    $region14: #{tpu_custom_call.1} parent=5 // pred_check_branch
      %93 = sbr.rel (%p91) target = $region16
    $region15: #{tpu_custom_call.1} parent=5 // pred_region
      // Predicated region
      $region17: #{tpu_custom_call.1} parent=15 // pred_check
        %p94 = pneg %p41
      $region18: #{tpu_custom_call.1} parent=15 // pred_check_branch
        %96 = sbr.rel (%p94) target = $region20
      $region19: #{tpu_custom_call.1} parent=15 // pred_region
        %s97 = smul.u32 5, %s15
        %p98 = scmp.lt.s32.totalorder %s14, 1
        %s99 = scalar_select %p98, %s14, 1
        %p100 = scmp.lt.s32.totalorder %s97, 4
        %s101 = scalar_select %p100, %s97, 4
        %s102 = smul.addr %s99, 5
        %s103 = sadd.s32 %s101, %s102
        %s104 = smul.addr %s103, 8
        %s105 = scalar_lea.vmem %s0, %s104
        %s106 = smul.u32 5, %s15
      $region20: #{tpu_custom_call.1} parent=15 // pred_fallthru
        _
    $region16: #{tpu_custom_call.1} parent=5 // pred_fallthru
      _
    %p107 = scmp.le.s32.totalorder 1, %s7
    %p108 = scmp.lt.s32.totalorder %s7, 3
    %p109 = pnand %p107, %p108
    %p110 = pneg %p109
    // Predicated region
    $region21: #{tpu_custom_call.1} parent=5 // pred_check
      _
    $region22: #{tpu_custom_call.1} parent=5 // pred_check_branch
      %112 = sbr.rel (%p109) target = $region24
    $region23: #{tpu_custom_call.1} parent=5 // pred_region
      %s113 = ssub.s32 %s7, 1
      %s114 = smul.u32 5, %s17
      %p115 = scmp.lt.s32.totalorder %s16, 1
      %s116 = scalar_select %p115, %s16, 1
      %p117 = scmp.lt.s32.totalorder %s114, 4
      %s118 = scalar_select %p117, %s114, 4
      %s119 = smul.addr %s116, 5
      %s120 = sadd.s32 %s118, %s119
      %s121 = smul.addr %s120, 8
      %s122 = scalar_lea.vmem %s0, %s121
      %p123 = pneg %p47
      %p124 = pneg %p44
      %p125 = pneg %p75
      %p126 = pneg %p72
      %s127 = smul.u32 5, %s17
      %p128 = scmp.lt.s32.totalorder %s16, 1
      %s129 = scalar_select %p128, %s16, 1
      %p130 = scmp.lt.s32.totalorder %s127, 4
      %s131 = scalar_select %p130, %s127, 4
      %s132 = smul.addr %s129, 5
      %s133 = sadd.s32 %s131, %s132
      %s134 = smul.addr %s133, 8
      %s135 = scalar_lea.vmem %s1, %s134
      %s136 = smul.u32 5, %s17
      %p137 = scmp.lt.s32.totalorder %s16, 1
      %s138 = scalar_select %p137, %s16, 1
      %p139 = scmp.lt.s32.totalorder %s136, 4
      %s140 = scalar_select %p139, %s136, 4
      %s141 = smul.addr %s138, 5
      %s142 = sadd.s32 %s140, %s141
      %s143 = smul.addr %s142, 8
      %s144 = scalar_lea.vmem %s0, %s143
      %s145 = smul.u32 5, %s17
      %s146 = smul.u32 5, %s17
      %p147 = scmp.lt.s32.totalorder %s16, 1
      %s148 = scalar_select %p147, %s16, 1
      %p149 = scmp.lt.s32.totalorder %s146, 4
      %s150 = scalar_select %p149, %s146, 4
      %s151 = smul.addr %s148, 5
      %s152 = sadd.s32 %s150, %s151
      %s153 = smul.addr %s152, 8
      %s154 = scalar_lea.vmem %s1, %s153
      %s155 = smul.u32 5, %s17
      %v156 = vld [vmem:[%s144] sm:$0xff]
      %v157 = vld [vmem:[%s144 + $0x8] sm:$0xff]
      %v158 = vld [vmem:[%s144 + $0x10] sm:$0xff]
      %v159 = vld [vmem:[%s144 + $0x18] sm:$0xff]
      %v160 = vld [vmem:[%s144 + $0x20] sm:$0xff]
      %v161 = vlaneseq
      %v162 = vand.u32 %v161, 127
      %vm163 = vcmask 261120
      %v164 = vsel %vm163, %v156, -inf
      %165 = vmax.xlane.f32.xlu0 %v164
      %v166 = vpop.xlane.xlu0 %165
      %v167 = vsel %vm163, %v157, -inf
      %168 = vmax.xlane.f32.xlu0 %v167
      %v169 = vpop.xlane.xlu0 %168
      %v170 = vsel %vm163, %v158, -inf
      %171 = vmax.xlane.f32.xlu0 %v170
      %v172 = vpop.xlane.xlu0 %171
      %v173 = vsel %vm163, %v159, -inf
      %174 = vmax.xlane.f32.xlu0 %v173
      %v175 = vpop.xlane.xlu0 %174
      %v176 = vsel %vm163, %v160, -inf
      %177 = vmax.xlane.f32.xlu0 %v176
      %v178 = vpop.xlane.xlu0 %177
      %vm179 = vcmp.eq.f32.partialorder %v156, %v166
      %vm180 = vcmp.eq.f32.partialorder %v157, %v169
      %vm181 = vcmp.eq.f32.partialorder %v158, %v172
      %vm182 = vcmp.eq.f32.partialorder %v159, %v175
      %vm183 = vcmp.eq.f32.partialorder %v160, %v178
      %v184 = vsel %vm179, %v162, 32
      %v185 = vsel %vm180, %v162, 32
      %v186 = vsel %vm181, %v162, 32
      %v187 = vsel %vm182, %v162, 32
      %v188 = vsel %vm183, %v162, 32
      %v189 = vsel %vm163, %v184, 2147483647
      %v190 = vand.u32 %v189, 65535
      %v191 = vshra.s32 %v189, 16
      %v192 = vcvt.s32.f32 %v190
      %v193 = vcvt.s32.f32 %v191
      %194 = vmin.xlane.f32.xlu0 %v193
      %v195 = vpop.xlane.xlu0 %194
      %vm196 = vcmp.eq.f32.partialorder %v193, %v195
      %v197 = vsel %vm196, %v192, inf
      %198 = vmin.xlane.f32.xlu0 %v197
      %v199 = vpop.xlane.xlu0 %198
      %v200 = vcvt.f32.s32 %v199
      %v201 = vcvt.f32.s32 %v195
      %v202 = vshll.u32 %v201, 16
      %v203 = vadd.s32 %v202, %v200
      %v204 = vsel %vm163, %v185, 2147483647
      %v205 = vand.u32 %v204, 65535
      %v206 = vshra.s32 %v204, 16
      %v207 = vcvt.s32.f32 %v205
      %v208 = vcvt.s32.f32 %v206
      %209 = vmin.xlane.f32.xlu0 %v208
      %v210 = vpop.xlane.xlu0 %209
      %vm211 = vcmp.eq.f32.partialorder %v208, %v210
      %v212 = vsel %vm211, %v207, inf
      %213 = vmin.xlane.f32.xlu0 %v212
      %v214 = vpop.xlane.xlu0 %213
      %v215 = vcvt.f32.s32 %v214
      %v216 = vcvt.f32.s32 %v210
      %v217 = vshll.u32 %v216, 16
      %v218 = vadd.s32 %v217, %v215
      %v219 = vsel %vm163, %v186, 2147483647
      %v220 = vand.u32 %v219, 65535
      %v221 = vshra.s32 %v219, 16
      %v222 = vcvt.s32.f32 %v220
      %v223 = vcvt.s32.f32 %v221
      %224 = vmin.xlane.f32.xlu0 %v223
      %v225 = vpop.xlane.xlu0 %224
      %vm226 = vcmp.eq.f32.partialorder %v223, %v225
      %v227 = vsel %vm226, %v222, inf
      %228 = vmin.xlane.f32.xlu0 %v227
      %v229 = vpop.xlane.xlu0 %228
      %v230 = vcvt.f32.s32 %v229
      %v231 = vcvt.f32.s32 %v225
      %v232 = vshll.u32 %v231, 16
      %v233 = vadd.s32 %v232, %v230
      %v234 = vsel %vm163, %v187, 2147483647
      %v235 = vand.u32 %v234, 65535
      %v236 = vshra.s32 %v234, 16
      %v237 = vcvt.s32.f32 %v235
      %v238 = vcvt.s32.f32 %v236
      %239 = vmin.xlane.f32.xlu0 %v238
      %v240 = vpop.xlane.xlu0 %239
      %vm241 = vcmp.eq.f32.partialorder %v238, %v240
      %v242 = vsel %vm241, %v237, inf
      %243 = vmin.xlane.f32.xlu0 %v242
      %v244 = vpop.xlane.xlu0 %243
      %v245 = vcvt.f32.s32 %v244
      %v246 = vcvt.f32.s32 %v240
      %v247 = vshll.u32 %v246, 16
      %v248 = vadd.s32 %v247, %v245
      %v249 = vsel %vm163, %v188, 2147483647
      %v250 = vand.u32 %v249, 65535
      %v251 = vshra.s32 %v249, 16
      %v252 = vcvt.s32.f32 %v250
      %v253 = vcvt.s32.f32 %v251
      %254 = vmin.xlane.f32.xlu0 %v253
      %v255 = vpop.xlane.xlu0 %254
      %vm256 = vcmp.eq.f32.partialorder %v253, %v255
      %v257 = vsel %vm256, %v252, inf
      %258 = vmin.xlane.f32.xlu0 %v257
      %v259 = vpop.xlane.xlu0 %258
      %v260 = vcvt.f32.s32 %v259
      %v261 = vcvt.f32.s32 %v255
      %v262 = vshll.u32 %v261, 16
      %v263 = vadd.s32 %v262, %v260
      %vm264 = vcmp.lt.s32.totalorder %v203, 31
      %v265 = vsel %vm264, %v203, 31
      %vm266 = vcmp.lt.s32.totalorder %v218, 31
      %v267 = vsel %vm266, %v218, 31
      %vm268 = vcmp.lt.s32.totalorder %v233, 31
      %v269 = vsel %vm268, %v233, 31
      %vm270 = vcmp.lt.s32.totalorder %v248, 31
      %v271 = vsel %vm270, %v248, 31
      %vm272 = vcmp.lt.s32.totalorder %v263, 31
      %v273 = vsel %vm272, %v263, 31
      %v274 = vrot.slane %v265, 7
      %v275 = vrot.slane %v267, 7
      %v276 = vrot.slane %v269, 7
      %v277 = vrot.slane %v271, 7
      %v278 = vrot.slane %v273, 7
      %v279 = vlaneseq
      %v280 = vshrl.u32 %v279, 7
      %vm281 = vcmp.lt.s32.totalorder %v280, 1
      %v282 = vsel %vm281, %v277, %v278
      %v283 = vsel %vm281, %v276, %v277
      %v284 = vsel %vm281, %v275, %v276
      %v285 = vsel %vm281, %v274, %v275
      %v286 = vsel %vm281, %v278, %v274
      %v287 = vld [vmem:[#allocation2] sm:$0x1]
      %p288 = scmp.eq.s32.totalorder %s17, 0
      %s289 = scalar_select %p288, 1, 0
      %v290 = vstv %s289
      %vm291 = vcmp.eq.s32.totalorder %v290, 1
      %v292 = vsel %vm291, 4294967295, %v287
      %v293 = vadd.s32 %v280, 8
      %v294 = vadd.s32 %v280, 16
      %v295 = vadd.s32 %v280, 24
      %v296 = vadd.s32 %v280, 32
      %vm297 = vcmp.eq.s32.totalorder %v280, 0
      %vm298 = vcmp.eq.s32.totalorder %v293, 0
      %vm299 = vcmp.eq.s32.totalorder %v294, 0
      %vm300 = vcmp.eq.s32.totalorder %v295, 0
      %vm301 = vcmp.eq.s32.totalorder %v296, 0
      %v302 = vlaneseq
      %v303 = vshrl.u32 %v302, 7
      %v304 = vsub.s32 0, %v303
      %v305 = vrot.slane %v292, %v304
      %v306 = vsel %vm297, %v305, %v286
      %v307 = vsel %vm298, %v305, %v285
      %v308 = vsel %vm299, %v305, %v284
      %v309 = vsel %vm300, %v305, %v283
      %v310 = vsel %vm301, %v305, %v282
      %s311 = smul.u32 %s17, 40
      %v312 = vstv %s311
      %v313 = vadd.s32 %v312, %v280
      %v314 = vadd.s32 %v312, %v293
      %v315 = vadd.s32 %v312, %v294
      %v316 = vadd.s32 %v312, %v295
      %v317 = vadd.s32 %v312, %v296
      %vm318 = vcmp.lt.s32.totalorder %v313, 40
      %vm319 = vcmp.lt.s32.totalorder %v314, 40
      %vm320 = vcmp.lt.s32.totalorder %v315, 40
      %vm321 = vcmp.lt.s32.totalorder %v316, 40
      %vm322 = vcmp.lt.s32.totalorder %v317, 40
      %vm323 = vcmp.ne.s32.totalorder %v265, %v306
      %vm324 = vcmp.ne.s32.totalorder %v267, %v307
      %vm325 = vcmp.ne.s32.totalorder %v269, %v308
      %vm326 = vcmp.ne.s32.totalorder %v271, %v309
      %vm327 = vcmp.ne.s32.totalorder %v273, %v310
      %vm328 = vcmp.ne.s32.totalorder %v265, 0
      %vm329 = vcmp.ne.s32.totalorder %v267, 0
      %vm330 = vcmp.ne.s32.totalorder %v269, 0
      %vm331 = vcmp.ne.s32.totalorder %v271, 0
      %vm332 = vcmp.ne.s32.totalorder %v273, 0
      %vm333 = vmand %vm323, %vm328
      %vm334 = vmand %vm324, %vm329
      %vm335 = vmand %vm325, %vm330
      %vm336 = vmand %vm326, %vm331
      %vm337 = vmand %vm327, %vm332
      %vm338 = vmand %vm333, %vm318
      %vm339 = vmand %vm334, %vm319
      %vm340 = vmand %vm335, %vm320
      %vm341 = vmand %vm336, %vm321
      %vm342 = vmand %vm337, %vm322
      %v343 = vsel %vm338, %v265, 4294967295
      %v344 = vsel %vm339, %v267, 4294967295
      %v345 = vsel %vm340, %v269, 4294967295
      %v346 = vsel %vm341, %v271, 4294967295
      %v347 = vsel %vm342, %v273, 4294967295
      %vm348 = vcmask 7175
      %349 = vst.msk [vmem:[#allocation2 - $0x7] sm:$0x80] %vm348, %v273
      %vm350 = vcmask 7168
      %351 = vst.msk [vmem:[%s154] sm:$0xff] %vm350, %v343
      %352 = vst.msk [vmem:[%s154 + $0x8] sm:$0xff] %vm350, %v344
      %353 = vst.msk [vmem:[%s154 + $0x10] sm:$0xff] %vm350, %v345
      %354 = vst.msk [vmem:[%s154 + $0x18] sm:$0xff] %vm350, %v346
      %355 = vst.msk [vmem:[%s154 + $0x20] sm:$0xff] %vm350, %v347
      %s356 = smul.u32 5, %s17
      %p357 = scmp.lt.s32.totalorder %s16, 1
      %s358 = scalar_select %p357, %s16, 1
      %p359 = scmp.lt.s32.totalorder %s356, 4
      %s360 = scalar_select %p359, %s356, 4
      %s361 = smul.addr %s358, 5
      %s362 = sadd.s32 %s360, %s361
      %s363 = smul.addr %s362, 8
      %s364 = scalar_lea.vmem %s1, %s363
      // Predicated region
      $region25: #{tpu_custom_call.1} parent=23 // pred_check
        %p365 = pneg %p72
      $region26: #{tpu_custom_call.1} parent=23 // pred_check_branch
        %367 = sbr.rel (%p365) target = $region28
      $region27: #{tpu_custom_call.1} parent=23 // pred_region
        %s368 = smul.u32 5, %s17
      $region28: #{tpu_custom_call.1} parent=23 // pred_fallthru
        _
    $region24: #{tpu_custom_call.1} parent=5 // pred_fallthru
      _
    %p369 = scmp.le.s32.totalorder 2, %s7
    // Predicated region
    $region29: #{tpu_custom_call.1} parent=5 // pred_check
      %p370 = pneg %p369
    $region30: #{tpu_custom_call.1} parent=5 // pred_check_branch
      %372 = sbr.rel (%p370) target = $region32
    $region31: #{tpu_custom_call.1} parent=5 // pred_region
      %s373 = ssub.s32 %s7, 2
      // Predicated region
      $region33: #{tpu_custom_call.1} parent=31 // pred_check
        %p374 = pneg %p78
      $region34: #{tpu_custom_call.1} parent=31 // pred_check_branch
        %376 = sbr.rel (%p374) target = $region36
      $region35: #{tpu_custom_call.1} parent=31 // pred_region
        %s377 = smul.u32 5, %s19
        %p378 = scmp.lt.s32.totalorder %s18, 1
        %s379 = scalar_select %p378, %s18, 1
        %p380 = scmp.lt.s32.totalorder %s377, 4
        %s381 = scalar_select %p380, %s377, 4
        %s382 = smul.addr %s379, 5
        %s383 = sadd.s32 %s381, %s382
        %s384 = smul.addr %s383, 8
        %s385 = scalar_lea.vmem %s1, %s384
      $region36: #{tpu_custom_call.1} parent=31 // pred_fallthru
        _
    $region32: #{tpu_custom_call.1} parent=5 // pred_fallthru
      _
  $region6: #{tpu_custom_call.1} parent=0 // loop_footer
    %s11 = sadd.s32 1, %s7
  $region7: #{tpu_custom_call.1} parent=0 // loop_footer_branch
    %6 = sbr.rel target = $region3
  $region8: #{tpu_custom_call.1} parent=0 // loop_exit
    _

</llo_original>
